<compile_context>
chip_gen: v7x
topology: tpu7x:2x2x1
jax: 0.10.0
libtpu: 0.0.40
codegen_flags: <defaults>
</compile_context>

<pallas_src>
import jax
import jax.numpy as jnp
from jax.experimental import pallas as pl
from jax.experimental.pallas import tpu as pltpu

IN_DIM = 20 * 3   # 60
HID_DIM = 256
OUT_DIM = 100

_TM_MAX = 4096    # max batch rows per grid step (fits all chips' VMEM with headroom)


def _round_up(x, m):
    return (x + m - 1) // m * m


def _cdiv(a, b):
    return -(-a // b)


def _pick_tm(batch):
    """Rows per grid step.

    Small batches: one full-array block (any size is a legal block when it equals the
    array dim), so tiny/ragged batches need no padding at all. Larger batches: at least
    2 tiles, an even tile count, 256-row aligned — balanced across v7x's two TensorCores
    and capped at _TM_MAX so per-step VMEM stays small while amortizing grid-step
    overhead.
    """
    if batch < 1024:
        return batch
    n_tiles = max(2, _cdiv(batch, _TM_MAX))
    if n_tiles % 2:
        n_tiles += 1
    return min(_TM_MAX, _round_up(_cdiv(batch, n_tiles), 256))


def _globalnet_kernel(x_ref, w1_ref, b1_ref, w2_ref, b2_ref, o_ref):
    # f32 -> bf16 cast of the input tile happens here (VPU filler hidden under DMA).
    x = x_ref[...].astype(w1_ref.dtype)
    h = jnp.dot(x, w1_ref[...], preferred_element_type=jnp.float32)
    h = jnp.maximum(h + b1_ref[...], 0.0)
    y = jnp.dot(h.astype(w2_ref.dtype), w2_ref[...], preferred_element_type=jnp.float32)
    o_ref[...] = jnp.maximum(y + b2_ref[...], 0.0).astype(o_ref.dtype)


def globalnet_forward(joints, w1_t, b1, w2_t, b2, *, out_dtype=jnp.float32):
    """joints: (B, 60) f32 -> (B, 100) out_dtype.

    w1_t (60, 256) / w2_t (256, 100): already-transposed weights (typically bf16),
    b1 (1, 256) / b2 (1, 100): f32 biases. See init_params / prepare_params — the
    layout/dtype conversion is done once at init, not per call.
    """
    B, in_dim = joints.shape
    assert in_dim == IN_DIM, f"expected {IN_DIM} input features, got {in_dim}"

    TM = _pick_tm(B)
    grid = (_cdiv(B, TM),)

    # Advisory cost hint for the XLA scheduler.
    flops = 2 * B * (IN_DIM * HID_DIM + HID_DIM * OUT_DIM)
    bytes_accessed = (
        joints.size * joints.dtype.itemsize
        + w1_t.size * w1_t.dtype.itemsize + b1.size * 4
        + w2_t.size * w2_t.dtype.itemsize + b2.size * 4
        + B * OUT_DIM * jnp.dtype(out_dtype).itemsize
    )
    cost = pl.CostEstimate(flops=flops, transcendentals=0, bytes_accessed=bytes_accessed)

    return pl.pallas_call(
        _globalnet_kernel,
        out_shape=jax.ShapeDtypeStruct((B, OUT_DIM), out_dtype),
        grid=grid,
        in_specs=[
            pl.BlockSpec((TM, IN_DIM), lambda i: (i, 0)),        # x: tiled over batch rows
            pl.BlockSpec((IN_DIM, HID_DIM), lambda i: (0, 0)),   # w1: VMEM-resident
            pl.BlockSpec((1, HID_DIM), lambda i: (0, 0)),        # b1
            pl.BlockSpec((HID_DIM, OUT_DIM), lambda i: (0, 0)),  # w2
            pl.BlockSpec((1, OUT_DIM), lambda i: (0, 0)),        # b2
        ],
        out_specs=pl.BlockSpec((TM, OUT_DIM), lambda i: (i, 0)),
        compiler_params=pltpu.CompilerParams(
            dimension_semantics=("parallel",),       # shard batch tiles across v7x's 2 TCs
            vmem_limit_bytes=48 * 1024 * 1024,       # stay under v7x's 64 MiB physical VMEM
        ),
        cost_estimate=cost,
    )(joints, w1_t, b1, w2_t, b2)


def prepare_params(w1, b1, w2, b2, *, weight_dtype=jnp.bfloat16):
    """One-time conversion from PyTorch nn.Linear layout (w: (out, in), b: (out,)) to the
    kernel layout: transposed (in, out) weights in weight_dtype, f32 (1, N) biases.
    Call once at init — not inside the forward path."""
    w1_t = jnp.asarray(w1, jnp.float32).T.astype(weight_dtype)          # (60, 256)
    w2_t = jnp.asarray(w2, jnp.float32).T.astype(weight_dtype)          # (256, 100)
    b1_r = jnp.asarray(b1, jnp.float32).reshape(1, HID_DIM)
    b2_r = jnp.asarray(b2, jnp.float32).reshape(1, OUT_DIM)
    return w1_t, b1_r, w2_t, b2_r


def init_params(key, *, weight_dtype=jnp.bfloat16):
    """Deterministic init mimicking PyTorch's default Linear init
    (uniform(-1/sqrt(fan_in), 1/sqrt(fan_in)) for both weight and bias),
    produced directly in kernel layout (hoisted out of the per-call path)."""
    k1, k2, k3, k4 = jax.random.split(key, 4)
    bound1 = IN_DIM ** -0.5
    bound2 = HID_DIM ** -0.5
    w1_t = jax.random.uniform(k1, (IN_DIM, HID_DIM), jnp.float32, -bound1, bound1)
    b1 = jax.random.uniform(k2, (1, HID_DIM), jnp.float32, -bound1, bound1)
    w2_t = jax.random.uniform(k3, (HID_DIM, OUT_DIM), jnp.float32, -bound2, bound2)
    b2 = jax.random.uniform(k4, (1, OUT_DIM), jnp.float32, -bound2, bound2)
    return w1_t.astype(weight_dtype), b1, w2_t.astype(weight_dtype), b2


def _ref_forward(joints, w1_t, b1, w2_t, b2):
    h = jnp.maximum(joints @ w1_t.astype(jnp.float32) + b1, 0.0)
    return jnp.maximum(h @ w2_t.astype(jnp.float32) + b2, 0.0)


if __name__ == "__main__":
    key = jax.random.PRNGKey(0)
    k_params, k_x1, k_x2, k_x3 = jax.random.split(key, 4)
    params = init_params(k_params)

    fwd = jax.jit(globalnet_forward)

    # bf16 matmul operands with f32 accumulation vs. full-f32 reference -> loose tolerance.
    tol = dict(atol=5e-2, rtol=5e-2)

    # 1) Small aligned batch (single full-array block).
    joints = jax.random.normal(k_x1, (8, IN_DIM), jnp.float32)
    out = jax.block_until_ready(fwd(joints, *params))
    ref = _ref_forward(joints, *params)
    assert out.shape == (8, OUT_DIM) and out.dtype == jnp.float32
    assert jnp.allclose(out, ref, **tol), float(jnp.max(jnp.abs(out - ref)))

    # 2) Ragged small batch (full-array block, no padding anywhere).
    joints2 = jax.random.normal(k_x2, (37, IN_DIM), jnp.float32)
    out2 = jax.block_until_ready(fwd(joints2, *params))
    ref2 = _ref_forward(joints2, *params)
    assert out2.shape == (37, OUT_DIM)
    assert jnp.allclose(out2, ref2, **tol), float(jnp.max(jnp.abs(out2 - ref2)))

    # 3) Multi-tile path: grid of 2 tiles (768 + partial 732), masked boundary writeback.
    joints3 = jax.random.normal(k_x3, (1500, IN_DIM), jnp.float32)
    out3 = jax.block_until_ready(fwd(joints3, *params))
    ref3 = _ref_forward(joints3, *params)
    assert out3.shape == (1500, OUT_DIM)
    assert jnp.allclose(out3, ref3, **tol), float(jnp.max(jnp.abs(out3 - ref3)))

    print("KERNEL_OK")
</pallas_src>

<mosaic_0001>
module attributes {stable_mosaic.version = 11 : i64} {
  func.func @_globalnet_kernel(%arg0: i32, %arg1: memref<8x60xf32, #tpu.memory_space<vmem>>, %arg2: memref<60x256xbf16, #tpu.memory_space<vmem>>, %arg3: memref<1x256xf32, #tpu.memory_space<vmem>>, %arg4: memref<256x100xbf16, #tpu.memory_space<vmem>>, %arg5: memref<1x100xf32, #tpu.memory_space<vmem>>, %arg6: memref<8x100xf32, #tpu.memory_space<vmem>>) attributes {dimension_semantics = [#tpu.dimension_semantics<parallel>], iteration_bounds = array<i64: 1>, scalar_prefetch = 0 : i64, scratch_operands = 0 : i64, tpu.core_type = #tpu.core_type<tc>, window_params = [{transform_indices = @transform_0, window_bounds = array<i64: 8, 60>}, {pipeline_mode = #tpu.pipeline_mode<synchronous>, transform_indices = @transform_1, window_bounds = array<i64: 60, 256>}, {pipeline_mode = #tpu.pipeline_mode<synchronous>, transform_indices = @transform_2, window_bounds = array<i64: 1, 256>}, {pipeline_mode = #tpu.pipeline_mode<synchronous>, transform_indices = @transform_3, window_bounds = array<i64: 256, 100>}, {pipeline_mode = #tpu.pipeline_mode<synchronous>, transform_indices = @transform_4, window_bounds = array<i64: 1, 100>}, {transform_indices = @transform_5, window_bounds = array<i64: 8, 100>}]} {
    %c0 = arith.constant 0 : index
    %c0_0 = arith.constant 0 : index
    %0 = vector.load %arg1[%c0, %c0_0] : memref<8x60xf32, #tpu.memory_space<vmem>>, vector<8x60xf32>
    %1 = arith.truncf %0 : vector<8x60xf32> to vector<8x60xbf16>
    %c0_1 = arith.constant 0 : index
    %c0_2 = arith.constant 0 : index
    %2 = vector.load %arg2[%c0_1, %c0_2] : memref<60x256xbf16, #tpu.memory_space<vmem>>, vector<60x256xbf16>
    %cst = arith.constant dense<0.000000e+00> : vector<8x256xf32>
    %3 = tpu.matmul %1, %2, %cst {dimension_numbers = #tpu.dot_dimension_numbers<[1], [0], [0], [1], [0, 0, 1, 1], [], []>} : vector<8x60xbf16>, vector<60x256xbf16>, vector<8x256xf32> -> vector<8x256xf32>
    %c0_3 = arith.constant 0 : index
    %c0_4 = arith.constant 0 : index
    %4 = vector.load %arg3[%c0_3, %c0_4] : memref<1x256xf32, #tpu.memory_space<vmem>>, vector<1x256xf32>
    %5 = vector.broadcast %4 : vector<1x256xf32> to vector<8x256xf32>
    %6 = arith.addf %3, %5 : vector<8x256xf32>
    %cst_5 = arith.constant 0.000000e+00 : f32
    %7 = vector.broadcast %cst_5 : f32 to vector<8x256xf32>
    %8 = arith.maximumf %6, %7 : vector<8x256xf32>
    %9 = arith.truncf %8 : vector<8x256xf32> to vector<8x256xbf16>
    %c0_6 = arith.constant 0 : index
    %c0_7 = arith.constant 0 : index
    %10 = vector.load %arg4[%c0_6, %c0_7] : memref<256x100xbf16, #tpu.memory_space<vmem>>, vector<256x100xbf16>
    %cst_8 = arith.constant dense<0.000000e+00> : vector<8x100xf32>
    %11 = tpu.matmul %9, %10, %cst_8 {dimension_numbers = #tpu.dot_dimension_numbers<[1], [0], [0], [1], [0, 0, 1, 1], [], []>} : vector<8x256xbf16>, vector<256x100xbf16>, vector<8x100xf32> -> vector<8x100xf32>
    %c0_9 = arith.constant 0 : index
    %c0_10 = arith.constant 0 : index
    %12 = vector.load %arg5[%c0_9, %c0_10] : memref<1x100xf32, #tpu.memory_space<vmem>>, vector<1x100xf32>
    %13 = vector.broadcast %12 : vector<1x100xf32> to vector<8x100xf32>
    %14 = arith.addf %11, %13 : vector<8x100xf32>
    %cst_11 = arith.constant 0.000000e+00 : f32
    %15 = vector.broadcast %cst_11 : f32 to vector<8x100xf32>
    %16 = arith.maximumf %14, %15 : vector<8x100xf32>
    %c0_12 = arith.constant 0 : index
    %c0_13 = arith.constant 0 : index
    %17 = vector.load %arg6[%c0_12, %c0_13] : memref<8x100xf32, #tpu.memory_space<vmem>>, vector<8x100xf32>
    tpu.vector_store %arg6[%c0_12, %c0_13], %16 {strides = array<i32>} : memref<8x100xf32, #tpu.memory_space<vmem>>, vector<8x100xf32>,
    return
  }
  func.func @transform_0(%arg0: i32) -> (i32, i32) {
    %c0_i32 = arith.constant 0 : i32
    %c0_i32_0 = arith.constant 0 : i32
    return %arg0, %c0_i32 : i32, i32
  }
  func.func @transform_1(%arg0: i32) -> (i32, i32) {
    %c0_i32 = arith.constant 0 : i32
    %c0_i32_0 = arith.constant 0 : i32
    %c0_i32_1 = arith.constant 0 : i32
    return %c0_i32, %c0_i32_0 : i32, i32
  }
  func.func @transform_2(%arg0: i32) -> (i32, i32) {
    %c0_i32 = arith.constant 0 : i32
    %c0_i32_0 = arith.constant 0 : i32
    %c0_i32_1 = arith.constant 0 : i32
    return %c0_i32, %c0_i32_0 : i32, i32
  }
  func.func @transform_3(%arg0: i32) -> (i32, i32) {
    %c0_i32 = arith.constant 0 : i32
    %c0_i32_0 = arith.constant 0 : i32
    %c0_i32_1 = arith.constant 0 : i32
    return %c0_i32, %c0_i32_0 : i32, i32
  }
  func.func @transform_4(%arg0: i32) -> (i32, i32) {
    %c0_i32 = arith.constant 0 : i32
    %c0_i32_0 = arith.constant 0 : i32
    %c0_i32_1 = arith.constant 0 : i32
    return %c0_i32, %c0_i32_0 : i32, i32
  }
  func.func @transform_5(%arg0: i32) -> (i32, i32) {
    %c0_i32 = arith.constant 0 : i32
    %c0_i32_0 = arith.constant 0 : i32
    return %arg0, %c0_i32 : i32, i32
  }
}

</mosaic_0001>

<llo_original>
// kernel: globalnet_forward.1
$region0: #{globalnet_forward.1}
  #allocation0 [shape = 'u32[]', space=smem, size = 0x4, offset = 0x4, fixed_abs, tag = 'smem constant byte address 0x4 - core index']
  #allocation1 [shape = 'u32[144,128]{1,0:T(1,128)}', space=vmem, size = 0x12000, scoped, tag = 'internal scratch']
  %s0 = inlined_call_operand.vmem [shape: f32[8,60], index: 0, kind: input, shape index: {}]
  %s1 = inlined_call_operand.vmem [shape: bf16[60,256], index: 1, kind: input, shape index: {}]
  %s2 = inlined_call_operand.vmem [shape: f32[1,256], index: 2, kind: input, shape index: {}]
  %s3 = inlined_call_operand.vmem [shape: bf16[256,100], index: 3, kind: input, shape index: {}]
  %s4 = inlined_call_operand.vmem [shape: f32[1,100], index: 4, kind: input, shape index: {}]
  %s5 = inlined_call_operand.hbm [shape: f32[8,100], index: 5, kind: output, shape index: {}]
  %s6 = sld [smem:[#allocation0]]
  $region30: #{globalnet_forward.1} parent=0
    _
  %s8 = ssub.s32 1, %s6
  %s9 = scalar_select 0, %s8, %s6
  $region1: #{globalnet_forward.1} parent=0
    #allocation2 [shape = 'u8[4096]{0}', space=vmem, size = 0x1000, scoped, tag = 'output window, operand 0, single buffered']
    #allocation3 [shape = 's32[1]{0}', space=sflag, size = 0x4, scoped, tag = 'scoped memory for globalnet_forward.1']
    %10 = vsyncpa [#allocation3], 0
    // Predicated region
    $region2: #{globalnet_forward.1} parent=1 // pred_check
      _
    $region3: #{globalnet_forward.1} parent=1 // pred_check_branch
      %12 = sbr.rel (0) target = $region5
    $region4: #{globalnet_forward.1} parent=1 // pred_region
      _
    $region5: #{globalnet_forward.1} parent=1 // pred_fallthru
      _
    // Predicated region
    $region6: #{globalnet_forward.1} parent=1 // pred_check
      _
    $region7: #{globalnet_forward.1} parent=1 // pred_check_branch
      %14 = sbr.rel (0) target = $region9
    $region8: #{globalnet_forward.1} parent=1 // pred_region
      _
    $region9: #{globalnet_forward.1} parent=1 // pred_fallthru
      _
    // Predicated region
    $region10: #{globalnet_forward.1} parent=1 // pred_check
      _
    $region11: #{globalnet_forward.1} parent=1 // pred_check_branch
      %16 = sbr.rel (0) target = $region13
    $region12: #{globalnet_forward.1} parent=1 // pred_region
      _
    $region13: #{globalnet_forward.1} parent=1 // pred_fallthru
      _
    // Predicated region
    $region14: #{globalnet_forward.1} parent=1 // pred_check
      _
    $region15: #{globalnet_forward.1} parent=1 // pred_check_branch
      %18 = sbr.rel (0) target = $region17
    $region16: #{globalnet_forward.1} parent=1 // pred_region
      _
    $region17: #{globalnet_forward.1} parent=1 // pred_fallthru
      _
    // Predicated region
    $region18: #{globalnet_forward.1} parent=1 // pred_check
      _
    $region19: #{globalnet_forward.1} parent=1 // pred_check_branch
      %20 = sbr.rel (0) target = $region21
    $region20: #{globalnet_forward.1} parent=1 // pred_region
      _
    $region21: #{globalnet_forward.1} parent=1 // pred_fallthru
      _
    %v22 = vld [vmem:[%s0] sm:$0xff]
    %v23 = vpack.c.bf16 %v22, %v22
    %v24 = vld [vmem:[%s1] sm:$0xff]
    %v25 = vld [vmem:[%s1 + $0x8] sm:$0xff]
    %v26 = vld [vmem:[%s1 + $0x10] sm:$0xff]
    %v27 = vld [vmem:[%s1 + $0x18] sm:$0xff]
    %v28 = vld [vmem:[%s1 + $0x20] sm:$0xff]
    %v29 = vld [vmem:[%s1 + $0x28] sm:$0xff]
    %v30 = vld [vmem:[%s1 + $0x30] sm:$0xff]
    %v31 = vld [vmem:[%s1 + $0x38] sm:$0x33]
    %v32 = vld [vmem:[%s2] sm:$0x3]
    %v34 = vlaneseq
    %v35 = vshrl.u32 %v34, 7
    %v36 = vsub.s32 0, %v35
    %v37 = vrot.slane %v32, %v36
    %v38 = vlaneseq
    %v39 = vshrl.u32 %v38, 7
    %v40 = vsub.s32 1, %v39
    %v41 = vrot.slane %v32, %v40
    %v52 = vunpack.c.l.b16 %v24
    %v53 = vunpack.c.h.b16 %v24
    %v54 = vunpack.c.l.b16 %v25
    %v55 = vunpack.c.h.b16 %v25
    %v56 = vunpack.c.l.b16 %v26
    %v57 = vunpack.c.h.b16 %v26
    %v58 = vunpack.c.l.b16 %v27
    %v59 = vunpack.c.h.b16 %v27
    %v60 = vunpack.c.l.b16 %v28
    %v61 = vunpack.c.h.b16 %v28
    %v62 = vunpack.c.l.b16 %v29
    %v63 = vunpack.c.h.b16 %v29
    %v64 = vunpack.c.l.b16 %v30
    %v65 = vunpack.c.h.b16 %v30
    %v66 = vunpack.c.l.b16 %v31
    %v67 = vunpack.c.h.b16 %v31
    %v68 = vpack.c.b16 %v54, %v52
    %v69 = vpack.c.b16 %v55, %v53
    %v70 = vpack.c.b16 %v58, %v56
    %v71 = vpack.c.b16 %v59, %v57
    %v72 = vpack.c.b16 %v62, %v60
    %v73 = vpack.c.b16 %v63, %v61
    %v74 = vpack.c.b16 %v66, %v64
    %v75 = vpack.c.b16 %v67, %v65
    %vm82 = vcmask 490496
    %v84 = vsel %vm82, %v23, 0
    %vm86 = vcmask 1045504
    %v88 = vsel %vm86, %v74, 0
    %v91 = vsel %vm86, %v75, 0
    %93 = vmatprep.subr.bf16.mxu0 %v69
    %94 = vmatpush1.bf16.msra.mxu0 %v68
    %95 = vmatprep.subr.bf16.mxu0 %v71
    %96 = vmatpush1.bf16.msra.mxu0 %v70
    %97 = vmatprep.subr.bf16.mxu0 %v73
    %98 = vmatpush1.bf16.msra.mxu0 %v72
    %99 = vmatprep.subr.bf16.mxu0 %v91
    %100 = vmatpush1.bf16.msra.mxu0 %v88
    %101 = vmatprep.subr.bf16.mxu0 0
    %102 = vmatpush1.bf16.msra.mxu0 0
    %103 = vmatprep.subr.bf16.mxu0 0
    %104 = vmatpush1.bf16.msra.mxu0 0
    %105 = vmatprep.subr.bf16.mxu0 0
    %106 = vmatpush1.bf16.msra.mxu0 0
    %107 = vmatprep.subr.bf16.mxu0 0
    %108 = vmatpush1.bf16.msra.mxu0 0
    %109 = vmatprep.subr.bf16.mxu0 0
    %110 = vmatpush1.bf16.msra.mxu0 0
    %111 = vmatprep.subr.bf16.mxu0 0
    %112 = vmatpush1.bf16.msra.mxu0 0
    %113 = vmatprep.subr.bf16.mxu0 0
    %114 = vmatpush1.bf16.msra.mxu0 0
    %115 = vmatprep.subr.bf16.mxu0 0
    %116 = vmatpush1.bf16.msra.mxu0 0
    %117 = vmatprep.subr.bf16.mxu0 0
    %118 = vmatpush1.bf16.msra.mxu0 0
    %119 = vmatprep.subr.bf16.mxu0 0
    %120 = vmatpush1.bf16.msra.mxu0 0
    %121 = vmatprep.subr.bf16.mxu0 0
    %122 = vmatpush1.bf16.msra.mxu0 0
    %123 = vmatprep.subr.bf16.mxu0 0
    %124 = vmatpush1.bf16.msra.mxu0 0
    %125 = vmatprep.mubr.bf16.mxu0 0
    %126 = vmatmul.mubr.bf16.gmra.mrb[0].mxu0 %v84
    %v127 = vpop.f32.mrb[0].mxu0
    %v128 = vadd.f32 %v37, %v127
    %v129 = vpop.f32.mrb[0].mxu0
    %v130 = vadd.f32 %v41, %v129
    %v131 = vpop.f32.mrb[0].mxu0
    %v132 = vpop.f32.mrb[0].mxu0
    %133 = vdwg.mxu0
    %v134 = vmax.f32 %v128, 0.0
    %v135 = vmax.f32 %v130, 0.0
    %v136 = vpack.c.bf16 %v134, %v134
    %v137 = vpack.c.bf16 %v135, %v135
    %v138 = vld [vmem:[%s3] sm:$0xf]
    %v139 = vld [vmem:[%s3 + $0x4] sm:$0xf]
    %v140 = vld [vmem:[%s3 + $0x8] sm:$0xf]
    %v141 = vld [vmem:[%s3 + $0xc] sm:$0xf]
    %v142 = vld [vmem:[%s3 + $0x10] sm:$0xf]
    %v143 = vld [vmem:[%s3 + $0x14] sm:$0xf]
    %v144 = vld [vmem:[%s3 + $0x18] sm:$0xf]
    %v145 = vld [vmem:[%s3 + $0x1c] sm:$0xf]
    %v146 = vld [vmem:[%s3 + $0x20] sm:$0xf]
    %v147 = vld [vmem:[%s3 + $0x24] sm:$0xf]
    %v148 = vld [vmem:[%s3 + $0x28] sm:$0xf]
    %v149 = vld [vmem:[%s3 + $0x2c] sm:$0xf]
    %v150 = vld [vmem:[%s3 + $0x30] sm:$0xf]
    %v151 = vld [vmem:[%s3 + $0x34] sm:$0xf]
    %v152 = vld [vmem:[%s3 + $0x38] sm:$0xf]
    %v153 = vld [vmem:[%s3 + $0x3c] sm:$0xf]
    %v154 = vld [vmem:[%s3 + $0x40] sm:$0xf]
    %v155 = vld [vmem:[%s3 + $0x44] sm:$0xf]
    %v156 = vld [vmem:[%s3 + $0x48] sm:$0xf]
    %v157 = vld [vmem:[%s3 + $0x4c] sm:$0xf]
    %v158 = vld [vmem:[%s3 + $0x50] sm:$0xf]
    %v159 = vld [vmem:[%s3 + $0x54] sm:$0xf]
    %v160 = vld [vmem:[%s3 + $0x58] sm:$0xf]
    %v161 = vld [vmem:[%s3 + $0x5c] sm:$0xf]
    %v162 = vld [vmem:[%s3 + $0x60] sm:$0xf]
    %v163 = vld [vmem:[%s3 + $0x64] sm:$0xf]
    %v164 = vld [vmem:[%s3 + $0x68] sm:$0xf]
    %v165 = vld [vmem:[%s3 + $0x6c] sm:$0xf]
    %v166 = vld [vmem:[%s3 + $0x70] sm:$0xf]
    %v167 = vld [vmem:[%s3 + $0x74] sm:$0xf]
    %v168 = vld [vmem:[%s3 + $0x78] sm:$0xf]
    %v169 = vld [vmem:[%s3 + $0x7c] sm:$0xf]
    %v170 = vld [vmem:[%s4] sm:$0x1]
    %v172 = vlaneseq
    %v173 = vshrl.u32 %v172, 7
    %v174 = vsub.s32 0, %v173
    %v175 = vrot.slane %v170, %v174
    %v209 = vunpack.c.l.b16 %v138
    %v210 = vunpack.c.l.b16 %v139
    %v211 = vunpack.c.l.b16 %v140
    %v212 = vunpack.c.l.b16 %v141
    %v213 = vunpack.c.l.b16 %v142
    %v214 = vunpack.c.l.b16 %v143
    %v215 = vunpack.c.l.b16 %v144
    %v216 = vunpack.c.l.b16 %v145
    %v217 = vunpack.c.l.b16 %v146
    %v218 = vunpack.c.l.b16 %v147
    %v219 = vunpack.c.l.b16 %v148
    %v220 = vunpack.c.l.b16 %v149
    %v221 = vunpack.c.l.b16 %v150
    %v222 = vunpack.c.l.b16 %v151
    %v223 = vunpack.c.l.b16 %v152
    %v224 = vunpack.c.l.b16 %v153
    %v225 = vunpack.c.l.b16 %v154
    %v226 = vunpack.c.l.b16 %v155
    %v227 = vunpack.c.l.b16 %v156
    %v228 = vunpack.c.l.b16 %v157
    %v229 = vunpack.c.l.b16 %v158
    %v230 = vunpack.c.l.b16 %v159
    %v231 = vunpack.c.l.b16 %v160
    %v232 = vunpack.c.l.b16 %v161
    %v233 = vunpack.c.l.b16 %v162
    %v234 = vunpack.c.l.b16 %v163
    %v235 = vunpack.c.l.b16 %v164
    %v236 = vunpack.c.l.b16 %v165
    %v237 = vunpack.c.l.b16 %v166
    %v238 = vunpack.c.l.b16 %v167
    %v239 = vunpack.c.l.b16 %v168
    %v240 = vunpack.c.l.b16 %v169
    %v241 = vpack.c.b16 %v210, %v209
    %v242 = vpack.c.b16 %v212, %v211
    %v243 = vpack.c.b16 %v214, %v213
    %v244 = vpack.c.b16 %v216, %v215
    %v245 = vpack.c.b16 %v218, %v217
    %v246 = vpack.c.b16 %v220, %v219
    %v247 = vpack.c.b16 %v222, %v221
    %v248 = vpack.c.b16 %v224, %v223
    %v249 = vpack.c.b16 %v226, %v225
    %v250 = vpack.c.b16 %v228, %v227
    %v251 = vpack.c.b16 %v230, %v229
    %v252 = vpack.c.b16 %v232, %v231
    %v253 = vpack.c.b16 %v234, %v233
    %v254 = vpack.c.b16 %v236, %v235
    %v255 = vpack.c.b16 %v238, %v237
    %v256 = vpack.c.b16 %v240, %v239
    %273 = vmatprep.subr.bf16.mxu0 0
    %274 = vmatpush1.bf16.msra.mxu0 %v241
    %275 = vmatprep.subr.bf16.mxu0 0
    %276 = vmatpush1.bf16.msra.mxu0 %v242
    %277 = vmatprep.subr.bf16.mxu0 0
    %278 = vmatpush1.bf16.msra.mxu0 %v243
    %279 = vmatprep.subr.bf16.mxu0 0
    %280 = vmatpush1.bf16.msra.mxu0 %v244
    %281 = vmatprep.subr.bf16.mxu0 0
    %282 = vmatpush1.bf16.msra.mxu0 %v245
    %283 = vmatprep.subr.bf16.mxu0 0
    %284 = vmatpush1.bf16.msra.mxu0 %v246
    %285 = vmatprep.subr.bf16.mxu0 0
    %286 = vmatpush1.bf16.msra.mxu0 %v247
    %287 = vmatprep.subr.bf16.mxu0 0
    %288 = vmatpush1.bf16.msra.mxu0 %v248
    %289 = vmatprep.subr.bf16.mxu0 0
    %290 = vmatpush1.bf16.msra.mxu0 %v249
    %291 = vmatprep.subr.bf16.mxu0 0
    %292 = vmatpush1.bf16.msra.mxu0 %v250
    %293 = vmatprep.subr.bf16.mxu0 0
    %294 = vmatpush1.bf16.msra.mxu0 %v251
    %295 = vmatprep.subr.bf16.mxu0 0
    %296 = vmatpush1.bf16.msra.mxu0 %v252
    %297 = vmatprep.subr.bf16.mxu0 0
    %298 = vmatpush1.bf16.msra.mxu0 %v253
    %299 = vmatprep.subr.bf16.mxu0 0
    %300 = vmatpush1.bf16.msra.mxu0 %v254
    %301 = vmatprep.subr.bf16.mxu0 0
    %302 = vmatpush1.bf16.msra.mxu0 %v255
    %303 = vmatprep.subr.bf16.mxu0 0
    %304 = vmatpush1.bf16.msra.mxu0 %v256
    %305 = vmatprep.mubr.bf16.mxu0 %v137
    %306 = vmatmul.mubr.bf16.gmra.mrb[0].mxu0 %v136
    %v307 = vpop.f32.mrb[0].mxu0
    %v308 = vadd.f32 %v175, %v307
    %v309 = vpop.f32.mrb[0].mxu0
    %v310 = vpop.f32.mrb[0].mxu0
    %v311 = vpop.f32.mrb[0].mxu0
    %312 = vdwg.mxu0
    %v313 = vmax.f32 %v308, 0.0
    %vm314 = vcmask 818176
    %315 = vst.msk [vmem:[#allocation2] sm:$0xff] %vm314, %v313
    // Predicated region
    $region22: #{globalnet_forward.1} parent=1 // pred_check
      _
    $region23: #{globalnet_forward.1} parent=1 // pred_check_branch
      %317 = sbr.rel (0) target = $region25
    $region24: #{globalnet_forward.1} parent=1 // pred_region
      %s319 = ssub.s32 128, 128
      %320 = vsyncadd [#allocation3], %s319
      %s322 = sshll.u32 [#allocation2], 4
      %s323 = int_to_ptr.vmem [resolvable:$true] %s322
      %325 = dma.vmem_to_hbm [thread:$0]  %s323, 128, %s5, [#allocation3]
    $region25: #{globalnet_forward.1} parent=1 // pred_fallthru
      _
    // Predicated region
    $region26: #{globalnet_forward.1} parent=1 // pred_check
      _
    $region27: #{globalnet_forward.1} parent=1 // pred_check_branch
      %327 = sbr.rel (0) target = $region29
    $region28: #{globalnet_forward.1} parent=1 // pred_region
      %328 = dma.done [#allocation3], 128
    $region29: #{globalnet_forward.1} parent=1 // pred_fallthru
      _
    %329 = vsyncpa [#allocation3], 1

</llo_original>
